<compile_context>
chip_gen: v7x
topology: tpu7x:2x2x1
jax: 0.10.0
libtpu: 0.0.40
codegen_flags: <defaults>
</compile_context>

<pallas_src>
import functools

import jax
import jax.numpy as jnp
from jax import lax
from jax.experimental import pallas as pl
from jax.experimental.pallas import tpu as pltpu


def _largest_divisor_at_most(n, cap):
    for d in range(min(n, cap), 0, -1):
        if n % d == 0:
            return d
    return 1


# ---------------------------------------------------------------------------
# Fused kernel: depthwise 3x3 (pad=1, groups=C) + BN + ReLU  -->  pointwise
# 1x1 (MXU matmul over channels) + BN + ReLU, for one (batch, row-tile) step.
# ---------------------------------------------------------------------------
def fused_dwsep_kernel(xp_ref, dw_w_ref, dw_b_ref, pw_w_ref, pw_b_ref, o_ref,
                       *, stride):
    # xp_ref  : (1, H+2, W+2, C)   zero-padded NHWC input (whole image; its
    #                              block index is constant across row tiles,
    #                              so Pallas DMAs it only once per batch elem)
    # dw_w_ref: (9, C)             depthwise taps, BN1 scale pre-folded
    # dw_b_ref: (1, C)             BN1 bias
    # pw_w_ref: (C, Cout)          pointwise weights, BN2 scale pre-folded
    # pw_b_ref: (1, Cout)          BN2 bias
    # o_ref   : (1, TH, Wo, Cout)  output row tile
    TH, Wo, Cout = o_ref.shape[1], o_ref.shape[2], o_ref.shape[3]
    C = xp_ref.shape[3]

    t = pl.program_id(1)
    row0 = pl.multiple_of(t * (TH * stride), TH * stride)

    dw_w = dw_w_ref[...].astype(jnp.float32)            # (9, C), tiny
    acc = jnp.zeros((TH, Wo, C), jnp.float32)
    for kh in range(3):                                  # 9 shifted taps (VPU)
        for kw in range(3):
            if stride == 1:
                rows = pl.ds(row0 + kh, TH)
                cols = pl.ds(kw, Wo)
            else:
                rows = pl.ds(row0 + kh, TH, stride)      # strided: only the
                cols = pl.ds(kw, Wo, stride)             # kept rows/cols
            tap = xp_ref[0, rows, cols, :].astype(jnp.float32)
            acc = acc + tap * dw_w[kh * 3 + kw].reshape(1, 1, C)

    # depthwise BN (scale already folded into the taps) + ReLU
    h = jnp.maximum(acc + dw_b_ref[...].astype(jnp.float32).reshape(1, 1, C),
                    0.0)

    # pointwise 1x1 conv == matmul over channels (MXU) + BN bias + ReLU
    y = jnp.dot(h.reshape(TH * Wo, C),
                pw_w_ref[...].astype(jnp.float32),
                preferred_element_type=jnp.float32)
    y = jnp.maximum(y + pw_b_ref[...].astype(jnp.float32), 0.0)
    o_ref[...] = y.reshape(1, TH, Wo, Cout).astype(o_ref.dtype)


# ---------------------------------------------------------------------------
# Wrapper
# ---------------------------------------------------------------------------
def depthwise_block(x_nchw, dw_w, dw_scale, dw_bias, pw_w, pw_scale, pw_bias,
                    stride=1):
    """Forward pass of the PyTorch `Depthwise` module (eval-mode BN folded).

    x_nchw: (N, Cin, H, W) float32, PyTorch layout
    dw_w  : (9, Cin)     depthwise 3x3 weights, tap-major (kh*3+kw, channel)
    pw_w  : (Cin, Cout)  pointwise 1x1 weights
    *_scale, *_bias: folded eval-mode BatchNorm affine params
    returns (N, Cout, Hout, Wout) float32, PyTorch layout
    """
    N, C, H, W = x_nchw.shape
    Cout = pw_w.shape[1]
    Ho = (H - 1) // stride + 1
    Wo = (W - 1) // stride + 1

    # Fold the BN scales into the conv weights (one tiny XLA op each).
    dw_wf = (dw_w * dw_scale[None, :]).astype(jnp.float32)      # (9, C)
    pw_wf = (pw_w * pw_scale[None, :]).astype(jnp.float32)      # (C, Cout)

    # NCHW -> NHWC plus the 1-pixel zero halo; XLA fuses the pad into the
    # transpose copy, so the input is materialized exactly once.
    x = jnp.transpose(x_nchw, (0, 2, 3, 1))
    xp = jnp.pad(x, ((0, 0), (1, 1), (1, 1), (0, 0)))

    # Row tile: TH*Wo rows feed the MXU matmul; enough grid steps for
    # double-buffered pipelining + megacore sharding even at small N.
    TH = _largest_divisor_at_most(Ho, 8)
    grid = (N, Ho // TH)

    out_nhwc = pl.pallas_call(
        functools.partial(fused_dwsep_kernel, stride=stride),
        out_shape=jax.ShapeDtypeStruct((N, Ho, Wo, Cout), x_nchw.dtype),
        grid=grid,
        in_specs=[
            # Whole padded image per batch element.  The block index does not
            # depend on the row-tile axis, so Pallas keeps it resident in
            # VMEM across row tiles (one DMA per batch element).
            pl.BlockSpec((1, H + 2, W + 2, C), lambda n, t: (n, 0, 0, 0)),
            pl.BlockSpec((9, C), lambda n, t: (0, 0)),
            pl.BlockSpec((1, C), lambda n, t: (0, 0)),
            pl.BlockSpec((C, Cout), lambda n, t: (0, 0)),
            pl.BlockSpec((1, Cout), lambda n, t: (0, 0)),
        ],
        out_specs=pl.BlockSpec((1, TH, Wo, Cout), lambda n, t: (n, t, 0, 0)),
        compiler_params=pltpu.CompilerParams(
            dimension_semantics=("parallel", "parallel")),
    )(xp, dw_wf, dw_bias[None, :].astype(jnp.float32),
      pw_wf, pw_bias[None, :].astype(jnp.float32))

    return jnp.transpose(out_nhwc, (0, 3, 1, 2))                # back to NCHW


# ---------------------------------------------------------------------------
# Pure-JAX reference (for correctness check) and synthetic parameters
# ---------------------------------------------------------------------------
def reference_block(x_nchw, dw_w, dw_scale, dw_bias, pw_w, pw_scale, pw_bias,
                    stride=1):
    N, C, H, W = x_nchw.shape
    x = jnp.transpose(x_nchw, (0, 2, 3, 1))
    rhs = dw_w.reshape(3, 3, C)[:, :, None, :]        # HWIO, I=1 (grouped)
    y = lax.conv_general_dilated(
        x, rhs, window_strides=(stride, stride), padding=((1, 1), (1, 1)),
        dimension_numbers=("NHWC", "HWIO", "NHWC"), feature_group_count=C,
        precision=lax.Precision.HIGHEST)
    y = jnp.maximum(y * dw_scale + dw_bias, 0.0)
    z = jnp.einsum("nhwc,cf->nhwf", y, pw_w, precision=lax.Precision.HIGHEST)
    z = jnp.maximum(z * pw_scale + pw_bias, 0.0)
    return jnp.transpose(z, (0, 3, 1, 2))


def init_params(key, cin, cout, eps=1e-5):
    """Deterministic synthetic parameters (BatchNorm folded, eval-mode stats)."""
    k = jax.random.split(key, 6)
    dw_w = jax.random.normal(k[0], (9, cin), jnp.float32) * 0.2
    pw_w = jax.random.normal(k[1], (cin, cout), jnp.float32) * 0.2
    g1 = 1.0 + 0.1 * jax.random.normal(k[2], (cin,), jnp.float32)
    b1 = 0.1 * jax.random.normal(k[3], (cin,), jnp.float32)
    g2 = 1.0 + 0.1 * jax.random.normal(k[4], (cout,), jnp.float32)
    b2 = 0.1 * jax.random.normal(k[5], (cout,), jnp.float32)
    mean1, var1 = jnp.zeros((cin,)), jnp.ones((cin,))
    mean2, var2 = jnp.zeros((cout,)), jnp.ones((cout,))
    dw_scale = g1 / jnp.sqrt(var1 + eps)
    dw_bias = b1 - mean1 * dw_scale
    pw_scale = g2 / jnp.sqrt(var2 + eps)
    pw_bias = b2 - mean2 * pw_scale
    return dw_w, dw_scale, dw_bias, pw_w, pw_scale, pw_bias


if __name__ == "__main__":
    key = jax.random.PRNGKey(0)
    kx, kp = jax.random.split(key)

    N, Cin, Cout, H, W = 2, 8, 16, 16, 16
    x = jax.random.normal(kx, (N, Cin, H, W), jnp.float32)       # NCHW input
    params = init_params(kp, Cin, Cout)

    out = depthwise_block(x, *params, stride=1)
    jax.block_until_ready(out)
    assert out.shape == (N, Cout, H, W), out.shape

    ref = reference_block(x, *params, stride=1)
    err = float(jnp.max(jnp.abs(out - ref)))
    assert err < 1e-3, f"max |err| = {err}"

    print("KERNEL_OK")
</pallas_src>

<mosaic_0001>
module attributes {stable_mosaic.version = 11 : i64} {
  func.func @fused_dwsep_kernel(%arg0: i32, %arg1: i32, %arg2: memref<1x18x18x8xf32, #tpu.memory_space<vmem>>, %arg3: memref<9x8xf32, #tpu.memory_space<vmem>>, %arg4: memref<1x8xf32, #tpu.memory_space<vmem>>, %arg5: memref<8x16xf32, #tpu.memory_space<vmem>>, %arg6: memref<1x16xf32, #tpu.memory_space<vmem>>, %arg7: memref<1x8x16x16xf32, #tpu.memory_space<vmem>>) attributes {dimension_semantics = [#tpu.dimension_semantics<parallel>, #tpu.dimension_semantics<parallel>], iteration_bounds = array<i64: 2, 2>, scalar_prefetch = 0 : i64, scratch_operands = 0 : i64, tpu.core_type = #tpu.core_type<tc>, window_params = [{transform_indices = @transform_0, window_bounds = array<i64: 1, 18, 18, 8>}, {pipeline_mode = #tpu.pipeline_mode<synchronous>, transform_indices = @transform_1, window_bounds = array<i64: 9, 8>}, {pipeline_mode = #tpu.pipeline_mode<synchronous>, transform_indices = @transform_2, window_bounds = array<i64: 1, 8>}, {pipeline_mode = #tpu.pipeline_mode<synchronous>, transform_indices = @transform_3, window_bounds = array<i64: 8, 16>}, {pipeline_mode = #tpu.pipeline_mode<synchronous>, transform_indices = @transform_4, window_bounds = array<i64: 1, 16>}, {transform_indices = @transform_5, window_bounds = array<i64: 1, 8, 16, 16>}]} {
    %c8_i32 = arith.constant 8 : i32
    %0 = arith.muli %arg1, %c8_i32 : i32
    %1 = tpu.assume_multiple %0, 8 : i32
    %c0 = arith.constant 0 : index
    %c0_0 = arith.constant 0 : index
    %2 = vector.load %arg3[%c0, %c0_0] : memref<9x8xf32, #tpu.memory_space<vmem>>, vector<9x8xf32>
    %cst = arith.constant 0.000000e+00 : f32
    %3 = vector.broadcast %cst : f32 to vector<8x16x8xf32>
    %c0_i32 = arith.constant 0 : i32
    %4 = arith.addi %1, %c0_i32 : i32
    %c0_1 = arith.constant 0 : index
    %5 = arith.index_cast %4 : i32 to index
    %c0_2 = arith.constant 0 : index
    %c0_3 = arith.constant 0 : index
    %6 = vector.load %arg2[%c0_1, %5, %c0_2, %c0_3] : memref<1x18x18x8xf32, #tpu.memory_space<vmem>>, vector<1x8x16x8xf32>
    %7 = vector.shape_cast %6 : vector<1x8x16x8xf32> to vector<8x16x8xf32>
    %8 = vector.extract_strided_slice %2 {offsets = [0, 0], sizes = [1, 8], strides = [1, 1]} : vector<9x8xf32> to vector<1x8xf32>
    %9 = vector.shape_cast %8 : vector<1x8xf32> to vector<8xf32>
    %10 = vector.shape_cast %9 : vector<8xf32> to vector<1x1x8xf32>
    %11 = vector.broadcast %10 : vector<1x1x8xf32> to vector<8x16x8xf32>
    %12 = arith.mulf %7, %11 : vector<8x16x8xf32>
    %13 = arith.addf %3, %12 : vector<8x16x8xf32>
    %c0_i32_4 = arith.constant 0 : i32
    %14 = arith.addi %1, %c0_i32_4 : i32
    %c0_5 = arith.constant 0 : index
    %15 = arith.index_cast %14 : i32 to index
    %c1 = arith.constant 1 : index
    %c0_6 = arith.constant 0 : index
    %16 = vector.load %arg2[%c0_5, %15, %c1, %c0_6] : memref<1x18x18x8xf32, #tpu.memory_space<vmem>>, vector<1x8x16x8xf32>
    %17 = vector.shape_cast %16 : vector<1x8x16x8xf32> to vector<8x16x8xf32>
    %18 = vector.extract_strided_slice %2 {offsets = [1, 0], sizes = [1, 8], strides = [1, 1]} : vector<9x8xf32> to vector<1x8xf32>
    %19 = vector.shape_cast %18 : vector<1x8xf32> to vector<8xf32>
    %20 = vector.shape_cast %19 : vector<8xf32> to vector<1x1x8xf32>
    %21 = vector.broadcast %20 : vector<1x1x8xf32> to vector<8x16x8xf32>
    %22 = arith.mulf %17, %21 : vector<8x16x8xf32>
    %23 = arith.addf %13, %22 : vector<8x16x8xf32>
    %c0_i32_7 = arith.constant 0 : i32
    %24 = arith.addi %1, %c0_i32_7 : i32
    %c0_8 = arith.constant 0 : index
    %25 = arith.index_cast %24 : i32 to index
    %c2 = arith.constant 2 : index
    %c0_9 = arith.constant 0 : index
    %26 = vector.load %arg2[%c0_8, %25, %c2, %c0_9] : memref<1x18x18x8xf32, #tpu.memory_space<vmem>>, vector<1x8x16x8xf32>
    %27 = vector.shape_cast %26 : vector<1x8x16x8xf32> to vector<8x16x8xf32>
    %28 = vector.extract_strided_slice %2 {offsets = [2, 0], sizes = [1, 8], strides = [1, 1]} : vector<9x8xf32> to vector<1x8xf32>
    %29 = vector.shape_cast %28 : vector<1x8xf32> to vector<8xf32>
    %30 = vector.shape_cast %29 : vector<8xf32> to vector<1x1x8xf32>
    %31 = vector.broadcast %30 : vector<1x1x8xf32> to vector<8x16x8xf32>
    %32 = arith.mulf %27, %31 : vector<8x16x8xf32>
    %33 = arith.addf %23, %32 : vector<8x16x8xf32>
    %c1_i32 = arith.constant 1 : i32
    %34 = arith.addi %1, %c1_i32 : i32
    %c0_10 = arith.constant 0 : index
    %35 = arith.index_cast %34 : i32 to index
    %c0_11 = arith.constant 0 : index
    %c0_12 = arith.constant 0 : index
    %36 = vector.load %arg2[%c0_10, %35, %c0_11, %c0_12] : memref<1x18x18x8xf32, #tpu.memory_space<vmem>>, vector<1x8x16x8xf32>
    %37 = vector.shape_cast %36 : vector<1x8x16x8xf32> to vector<8x16x8xf32>
    %38 = vector.extract_strided_slice %2 {offsets = [3, 0], sizes = [1, 8], strides = [1, 1]} : vector<9x8xf32> to vector<1x8xf32>
    %39 = vector.shape_cast %38 : vector<1x8xf32> to vector<8xf32>
    %40 = vector.shape_cast %39 : vector<8xf32> to vector<1x1x8xf32>
    %41 = vector.broadcast %40 : vector<1x1x8xf32> to vector<8x16x8xf32>
    %42 = arith.mulf %37, %41 : vector<8x16x8xf32>
    %43 = arith.addf %33, %42 : vector<8x16x8xf32>
    %c1_i32_13 = arith.constant 1 : i32
    %44 = arith.addi %1, %c1_i32_13 : i32
    %c0_14 = arith.constant 0 : index
    %45 = arith.index_cast %44 : i32 to index
    %c1_15 = arith.constant 1 : index
    %c0_16 = arith.constant 0 : index
    %46 = vector.load %arg2[%c0_14, %45, %c1_15, %c0_16] : memref<1x18x18x8xf32, #tpu.memory_space<vmem>>, vector<1x8x16x8xf32>
    %47 = vector.shape_cast %46 : vector<1x8x16x8xf32> to vector<8x16x8xf32>
    %48 = vector.extract_strided_slice %2 {offsets = [4, 0], sizes = [1, 8], strides = [1, 1]} : vector<9x8xf32> to vector<1x8xf32>
    %49 = vector.shape_cast %48 : vector<1x8xf32> to vector<8xf32>
    %50 = vector.shape_cast %49 : vector<8xf32> to vector<1x1x8xf32>
    %51 = vector.broadcast %50 : vector<1x1x8xf32> to vector<8x16x8xf32>
    %52 = arith.mulf %47, %51 : vector<8x16x8xf32>
    %53 = arith.addf %43, %52 : vector<8x16x8xf32>
    %c1_i32_17 = arith.constant 1 : i32
    %54 = arith.addi %1, %c1_i32_17 : i32
    %c0_18 = arith.constant 0 : index
    %55 = arith.index_cast %54 : i32 to index
    %c2_19 = arith.constant 2 : index
    %c0_20 = arith.constant 0 : index
    %56 = vector.load %arg2[%c0_18, %55, %c2_19, %c0_20] : memref<1x18x18x8xf32, #tpu.memory_space<vmem>>, vector<1x8x16x8xf32>
    %57 = vector.shape_cast %56 : vector<1x8x16x8xf32> to vector<8x16x8xf32>
    %58 = vector.extract_strided_slice %2 {offsets = [5, 0], sizes = [1, 8], strides = [1, 1]} : vector<9x8xf32> to vector<1x8xf32>
    %59 = vector.shape_cast %58 : vector<1x8xf32> to vector<8xf32>
    %60 = vector.shape_cast %59 : vector<8xf32> to vector<1x1x8xf32>
    %61 = vector.broadcast %60 : vector<1x1x8xf32> to vector<8x16x8xf32>
    %62 = arith.mulf %57, %61 : vector<8x16x8xf32>
    %63 = arith.addf %53, %62 : vector<8x16x8xf32>
    %c2_i32 = arith.constant 2 : i32
    %64 = arith.addi %1, %c2_i32 : i32
    %c0_21 = arith.constant 0 : index
    %65 = arith.index_cast %64 : i32 to index
    %c0_22 = arith.constant 0 : index
    %c0_23 = arith.constant 0 : index
    %66 = vector.load %arg2[%c0_21, %65, %c0_22, %c0_23] : memref<1x18x18x8xf32, #tpu.memory_space<vmem>>, vector<1x8x16x8xf32>
    %67 = vector.shape_cast %66 : vector<1x8x16x8xf32> to vector<8x16x8xf32>
    %68 = vector.extract_strided_slice %2 {offsets = [6, 0], sizes = [1, 8], strides = [1, 1]} : vector<9x8xf32> to vector<1x8xf32>
    %69 = vector.shape_cast %68 : vector<1x8xf32> to vector<8xf32>
    %70 = vector.shape_cast %69 : vector<8xf32> to vector<1x1x8xf32>
    %71 = vector.broadcast %70 : vector<1x1x8xf32> to vector<8x16x8xf32>
    %72 = arith.mulf %67, %71 : vector<8x16x8xf32>
    %73 = arith.addf %63, %72 : vector<8x16x8xf32>
    %c2_i32_24 = arith.constant 2 : i32
    %74 = arith.addi %1, %c2_i32_24 : i32
    %c0_25 = arith.constant 0 : index
    %75 = arith.index_cast %74 : i32 to index
    %c1_26 = arith.constant 1 : index
    %c0_27 = arith.constant 0 : index
    %76 = vector.load %arg2[%c0_25, %75, %c1_26, %c0_27] : memref<1x18x18x8xf32, #tpu.memory_space<vmem>>, vector<1x8x16x8xf32>
    %77 = vector.shape_cast %76 : vector<1x8x16x8xf32> to vector<8x16x8xf32>
    %78 = vector.extract_strided_slice %2 {offsets = [7, 0], sizes = [1, 8], strides = [1, 1]} : vector<9x8xf32> to vector<1x8xf32>
    %79 = vector.shape_cast %78 : vector<1x8xf32> to vector<8xf32>
    %80 = vector.shape_cast %79 : vector<8xf32> to vector<1x1x8xf32>
    %81 = vector.broadcast %80 : vector<1x1x8xf32> to vector<8x16x8xf32>
    %82 = arith.mulf %77, %81 : vector<8x16x8xf32>
    %83 = arith.addf %73, %82 : vector<8x16x8xf32>
    %c2_i32_28 = arith.constant 2 : i32
    %84 = arith.addi %1, %c2_i32_28 : i32
    %c0_29 = arith.constant 0 : index
    %85 = arith.index_cast %84 : i32 to index
    %c2_30 = arith.constant 2 : index
    %c0_31 = arith.constant 0 : index
    %86 = vector.load %arg2[%c0_29, %85, %c2_30, %c0_31] : memref<1x18x18x8xf32, #tpu.memory_space<vmem>>, vector<1x8x16x8xf32>
    %87 = vector.shape_cast %86 : vector<1x8x16x8xf32> to vector<8x16x8xf32>
    %88 = vector.extract_strided_slice %2 {offsets = [8, 0], sizes = [1, 8], strides = [1, 1]} : vector<9x8xf32> to vector<1x8xf32>
    %89 = vector.shape_cast %88 : vector<1x8xf32> to vector<8xf32>
    %90 = vector.shape_cast %89 : vector<8xf32> to vector<1x1x8xf32>
    %91 = vector.broadcast %90 : vector<1x1x8xf32> to vector<8x16x8xf32>
    %92 = arith.mulf %87, %91 : vector<8x16x8xf32>
    %93 = arith.addf %83, %92 : vector<8x16x8xf32>
    %c0_32 = arith.constant 0 : index
    %c0_33 = arith.constant 0 : index
    %94 = vector.load %arg4[%c0_32, %c0_33] : memref<1x8xf32, #tpu.memory_space<vmem>>, vector<1x8xf32>
    %95 = vector.shape_cast %94 : vector<1x8xf32> to vector<1x1x8xf32>
    %96 = vector.broadcast %95 : vector<1x1x8xf32> to vector<8x16x8xf32>
    %97 = arith.addf %93, %96 : vector<8x16x8xf32>
    %cst_34 = arith.constant 0.000000e+00 : f32
    %98 = vector.broadcast %cst_34 : f32 to vector<8x16x8xf32>
    %99 = arith.maximumf %97, %98 : vector<8x16x8xf32>
    %100 = vector.shape_cast %99 : vector<8x16x8xf32> to vector<128x8xf32>
    %c0_35 = arith.constant 0 : index
    %c0_36 = arith.constant 0 : index
    %101 = vector.load %arg5[%c0_35, %c0_36] : memref<8x16xf32, #tpu.memory_space<vmem>>, vector<8x16xf32>
    %cst_37 = arith.constant dense<0.000000e+00> : vector<128x16xf32>
    %102 = tpu.matmul %100, %101, %cst_37 {dimension_numbers = #tpu.dot_dimension_numbers<[1], [0], [0], [1], [0, 0, 1, 1], [], []>} : vector<128x8xf32>, vector<8x16xf32>, vector<128x16xf32> -> vector<128x16xf32>
    %c0_38 = arith.constant 0 : index
    %c0_39 = arith.constant 0 : index
    %103 = vector.load %arg6[%c0_38, %c0_39] : memref<1x16xf32, #tpu.memory_space<vmem>>, vector<1x16xf32>
    %104 = vector.broadcast %103 : vector<1x16xf32> to vector<128x16xf32>
    %105 = arith.addf %102, %104 : vector<128x16xf32>
    %cst_40 = arith.constant 0.000000e+00 : f32
    %106 = vector.broadcast %cst_40 : f32 to vector<128x16xf32>
    %107 = arith.maximumf %105, %106 : vector<128x16xf32>
    %108 = vector.shape_cast %107 : vector<128x16xf32> to vector<1x8x16x16xf32>
    %c0_41 = arith.constant 0 : index
    %c0_42 = arith.constant 0 : index
    %c0_43 = arith.constant 0 : index
    %c0_44 = arith.constant 0 : index
    %109 = vector.load %arg7[%c0_41, %c0_42, %c0_43, %c0_44] : memref<1x8x16x16xf32, #tpu.memory_space<vmem>>, vector<1x8x16x16xf32>
    tpu.vector_store %arg7[%c0_41, %c0_42, %c0_43, %c0_44], %108 {strides = array<i32>} : memref<1x8x16x16xf32, #tpu.memory_space<vmem>>, vector<1x8x16x16xf32>,
    return
  }
  func.func @transform_0(%arg0: i32, %arg1: i32) -> (i32, i32, i32, i32) {
    %c0_i32 = arith.constant 0 : i32
    %c0_i32_0 = arith.constant 0 : i32
    %c0_i32_1 = arith.constant 0 : i32
    %c0_i32_2 = arith.constant 0 : i32
    return %arg0, %c0_i32, %c0_i32_0, %c0_i32_1 : i32, i32, i32, i32
  }
  func.func @transform_1(%arg0: i32, %arg1: i32) -> (i32, i32) {
    %c0_i32 = arith.constant 0 : i32
    %c0_i32_0 = arith.constant 0 : i32
    %c0_i32_1 = arith.constant 0 : i32
    return %c0_i32, %c0_i32_0 : i32, i32
  }
  func.func @transform_2(%arg0: i32, %arg1: i32) -> (i32, i32) {
    %c0_i32 = arith.constant 0 : i32
    %c0_i32_0 = arith.constant 0 : i32
    %c0_i32_1 = arith.constant 0 : i32
    return %c0_i32, %c0_i32_0 : i32, i32
  }
  func.func @transform_3(%arg0: i32, %arg1: i32) -> (i32, i32) {
    %c0_i32 = arith.constant 0 : i32
    %c0_i32_0 = arith.constant 0 : i32
    %c0_i32_1 = arith.constant 0 : i32
    return %c0_i32, %c0_i32_0 : i32, i32
  }
  func.func @transform_4(%arg0: i32, %arg1: i32) -> (i32, i32) {
    %c0_i32 = arith.constant 0 : i32
    %c0_i32_0 = arith.constant 0 : i32
    %c0_i32_1 = arith.constant 0 : i32
    return %c0_i32, %c0_i32_0 : i32, i32
  }
  func.func @transform_5(%arg0: i32, %arg1: i32) -> (i32, i32, i32, i32) {
    %c0_i32 = arith.constant 0 : i32
    %c0_i32_0 = arith.constant 0 : i32
    %c0_i32_1 = arith.constant 0 : i32
    return %arg0, %arg1, %c0_i32, %c0_i32_0 : i32, i32, i32, i32
  }
}

</mosaic_0001>

<llo_original>
// kernel: tpu_custom_call.1
$region0: #{tpu_custom_call.1}
  #allocation0 [shape = 'u32[]', space=smem, size = 0x4, offset = 0x4, fixed_abs, tag = 'smem constant byte address 0x4 - core index']
  #allocation1 [shape = 'u32[144,128]{1,0:T(1,128)}', space=vmem, size = 0x12000, scoped, tag = 'internal scratch']
  %s0 = inlined_call_operand.vmem [shape: f32[2,18,18,8], index: 0, kind: input, shape index: {}]
  %s1 = inlined_call_operand.vmem [shape: f32[9,8], index: 1, kind: input, shape index: {}]
  %s2 = inlined_call_operand.vmem [shape: f32[1,8], index: 2, kind: input, shape index: {}]
  %s3 = inlined_call_operand.vmem [shape: f32[8,16], index: 3, kind: input, shape index: {}]
  %s4 = inlined_call_operand.vmem [shape: f32[1,16], index: 4, kind: input, shape index: {}]
  %s5 = inlined_call_operand.hbm [shape: f32[2,16,16,16], index: 5, kind: output, shape index: {}]
  %s6 = sld [smem:[#allocation0]]
  $region53: #{tpu_custom_call.1} parent=0
    _
  %s8 = ssub.s32 1, %s6
  %s9 = scalar_select 0, %s8, %s6
  $region1: #{tpu_custom_call.1} parent=0
    #allocation2 [shape = 'u8[131072]{0}', space=vmem, size = 0x20000, scoped, tag = 'output window, operand 0']
    #allocation3 [shape = 's32[2]{0}', space=sflag, size = 0x8, scoped, tag = 'scoped memory for tpu_custom_call.1']
    %10 = vsyncpa [#allocation3], 0
    %s11 = scalar_lea.sflag [#allocation3], 1
    %12 = vsyncpa %s11, 0
    loop: start=0, step=1, limit=6
    $region2: #{tpu_custom_call.1} parent=1 // loop_pre_header
      _
    $region3: #{tpu_custom_call.1} parent=1 // loop_header
      %s14 = sphi 0, %s18
      %p15 = scmp.ge.s32.totalorder %s14, 6
      %s21 = sphi 0, %s33
      %s22 = sphi 0, %s29
      %s23 = sphi 0, %s21
      %s24 = sphi 0, %s22
      %s25 = sphi 0, %s23
      %s26 = sphi 0, %s24
      %s36 = sphi 0, %s38
      %s39 = sphi 0, %s36
      %s40 = sphi 0, %s39
      %s56 = sphi 0, %s40
      %s60 = sphi 0, %s60
      %s62 = sphi 0, %s60
      %s63 = sphi 0, %s62
      %s77 = sphi 0, %s63
      %s81 = sphi 0, %s81
      %s83 = sphi 0, %s81
      %s84 = sphi 0, %s83
      %s98 = sphi 0, %s84
      %s102 = sphi 0, %s102
      %s104 = sphi 0, %s102
      %s105 = sphi 0, %s104
      %s119 = sphi 0, %s105
      %s123 = sphi 0, %s123
      %s125 = sphi 0, %s123
      %s126 = sphi 0, %s125
      %s140 = sphi 0, %s126
      %s148 = sphi 0, %s150
      %s151 = sphi 0, %s148
      %s152 = sphi 0, %s151
      %s168 = sphi 0, %s152
    $region4: #{tpu_custom_call.1} parent=1 // loop_header_branch
      %17 = sbr.rel (%p15) target = $region8
    $region5: #{tpu_custom_call.1} parent=1 // loop_body
      %s19 = ssub.s32 %s14, 1
      %s20 = ssub.s32 %s14, 2
      %s27 = sadd.s32 1, %s22
      %p28 = scmp.ge.s32.totalorder %s27, 2
      %s29 = scalar_select %p28, 0, %s27
      %s30 = sadd.s32 1, %s21
      %s31 = scalar_select %p28, %s30, %s21
      %p32 = scmp.ge.s32.totalorder %s31, 2
      %s33 = scalar_select %p32, 0, %s31
      %s34 = ssub.s32 %s21, %s33
      %p35 = scmp.eq.s32.totalorder %s34, 0
      %s37 = sadd.s32 %s36, 1
      %s38 = scalar_select %p35, %s36, %s37
      %p41 = pneg %p35
      %p42 = scmp.eq.s32.totalorder %s14, 3
      %p43 = por %p41, %p42
      %p44 = scmp.ne.s32.totalorder %s36, %s39
      %p45 = scmp.eq.s32.totalorder %s14, 0
      %p46 = por %p44, %p45
      %p47 = scmp.ne.s32.totalorder %s36, %s39
      %p48 = scmp.eq.s32.totalorder %s19, 3
      %p49 = por %p47, %p48
      %p50 = scmp.ne.s32.totalorder %s39, %s40
      %p51 = scmp.eq.s32.totalorder %s19, 0
      %p52 = por %p50, %p51
      %p53 = scmp.ne.s32.totalorder %s39, %s40
      %p54 = scmp.eq.s32.totalorder %s20, 3
      %p55 = por %p53, %p54
      %p57 = scmp.ne.s32.totalorder %s40, %s56
      %p58 = scmp.eq.s32.totalorder %s20, 0
      %p59 = por %p57, %p58
      %s61 = sadd.s32 %s60, 1
      %p64 = scmp.eq.s32.totalorder %s14, 3
      %p65 = scmp.ne.s32.totalorder %s60, %s62
      %p66 = scmp.eq.s32.totalorder %s14, 0
      %p67 = por %p65, %p66
      %p68 = scmp.ne.s32.totalorder %s60, %s62
      %p69 = scmp.eq.s32.totalorder %s19, 3
      %p70 = por %p68, %p69
      %p71 = scmp.ne.s32.totalorder %s62, %s63
      %p72 = scmp.eq.s32.totalorder %s19, 0
      %p73 = por %p71, %p72
      %p74 = scmp.ne.s32.totalorder %s62, %s63
      %p75 = scmp.eq.s32.totalorder %s20, 3
      %p76 = por %p74, %p75
      %p78 = scmp.ne.s32.totalorder %s63, %s77
      %p79 = scmp.eq.s32.totalorder %s20, 0
      %p80 = por %p78, %p79
      %s82 = sadd.s32 %s81, 1
      %p85 = scmp.eq.s32.totalorder %s14, 3
      %p86 = scmp.ne.s32.totalorder %s81, %s83
      %p87 = scmp.eq.s32.totalorder %s14, 0
      %p88 = por %p86, %p87
      %p89 = scmp.ne.s32.totalorder %s81, %s83
      %p90 = scmp.eq.s32.totalorder %s19, 3
      %p91 = por %p89, %p90
      %p92 = scmp.ne.s32.totalorder %s83, %s84
      %p93 = scmp.eq.s32.totalorder %s19, 0
      %p94 = por %p92, %p93
      %p95 = scmp.ne.s32.totalorder %s83, %s84
      %p96 = scmp.eq.s32.totalorder %s20, 3
      %p97 = por %p95, %p96
      %p99 = scmp.ne.s32.totalorder %s84, %s98
      %p100 = scmp.eq.s32.totalorder %s20, 0
      %p101 = por %p99, %p100
      %s103 = sadd.s32 %s102, 1
      %p106 = scmp.eq.s32.totalorder %s14, 3
      %p107 = scmp.ne.s32.totalorder %s102, %s104
      %p108 = scmp.eq.s32.totalorder %s14, 0
      %p109 = por %p107, %p108
      %p110 = scmp.ne.s32.totalorder %s102, %s104
      %p111 = scmp.eq.s32.totalorder %s19, 3
      %p112 = por %p110, %p111
      %p113 = scmp.ne.s32.totalorder %s104, %s105
      %p114 = scmp.eq.s32.totalorder %s19, 0
      %p115 = por %p113, %p114
      %p116 = scmp.ne.s32.totalorder %s104, %s105
      %p117 = scmp.eq.s32.totalorder %s20, 3
      %p118 = por %p116, %p117
      %p120 = scmp.ne.s32.totalorder %s105, %s119
      %p121 = scmp.eq.s32.totalorder %s20, 0
      %p122 = por %p120, %p121
      %s124 = sadd.s32 %s123, 1
      %p127 = scmp.eq.s32.totalorder %s14, 3
      %p128 = scmp.ne.s32.totalorder %s123, %s125
      %p129 = scmp.eq.s32.totalorder %s14, 0
      %p130 = por %p128, %p129
      %p131 = scmp.ne.s32.totalorder %s123, %s125
      %p132 = scmp.eq.s32.totalorder %s19, 3
      %p133 = por %p131, %p132
      %p134 = scmp.ne.s32.totalorder %s125, %s126
      %p135 = scmp.eq.s32.totalorder %s19, 0
      %p136 = por %p134, %p135
      %p137 = scmp.ne.s32.totalorder %s125, %s126
      %p138 = scmp.eq.s32.totalorder %s20, 3
      %p139 = por %p137, %p138
      %p141 = scmp.ne.s32.totalorder %s126, %s140
      %p142 = scmp.eq.s32.totalorder %s20, 0
      %p143 = por %p141, %p142
      %s144 = ssub.s32 %s21, %s33
      %s145 = ssub.s32 %s22, %s29
      %s146 = sor.u32 %s144, %s145
      %p147 = scmp.eq.s32.totalorder %s146, 0
      %s149 = sadd.s32 %s148, 1
      %s150 = scalar_select %p147, %s148, %s149
      %p153 = pneg %p147
      %p154 = scmp.eq.s32.totalorder %s14, 3
      %p155 = por %p153, %p154
      %p156 = scmp.ne.s32.totalorder %s148, %s151
      %p157 = scmp.eq.s32.totalorder %s14, 0
      %p158 = por %p156, %p157
      %p159 = scmp.ne.s32.totalorder %s148, %s151
      %p160 = scmp.eq.s32.totalorder %s19, 3
      %p161 = por %p159, %p160
      %p162 = scmp.ne.s32.totalorder %s151, %s152
      %p163 = scmp.eq.s32.totalorder %s19, 0
      %p164 = por %p162, %p163
      %p165 = scmp.ne.s32.totalorder %s151, %s152
      %p166 = scmp.eq.s32.totalorder %s20, 3
      %p167 = por %p165, %p166
      %p169 = scmp.ne.s32.totalorder %s152, %s168
      %p170 = scmp.eq.s32.totalorder %s20, 0
      %p171 = por %p169, %p170
      %p172 = scmp.le.s32.totalorder 1, %s14
      %p173 = scmp.lt.s32.totalorder %s14, 5
      %p174 = pnand %p172, %p173
      %p175 = pneg %p174
      // Predicated region
      $region9: #{tpu_custom_call.1} parent=5 // pred_check
        _
      $region10: #{tpu_custom_call.1} parent=5 // pred_check_branch
        %177 = sbr.rel (%p174) target = $region12
      $region11: #{tpu_custom_call.1} parent=5 // pred_region
        %s178 = ssub.s32 %s14, 1
        // Predicated region
        $region13: #{tpu_custom_call.1} parent=11 // pred_check
          %p179 = pneg %p73
        $region14: #{tpu_custom_call.1} parent=11 // pred_check_branch
          %181 = sbr.rel (%p179) target = $region16
        $region15: #{tpu_custom_call.1} parent=11 // pred_region
          _
        $region16: #{tpu_custom_call.1} parent=11 // pred_fallthru
          _
        // Predicated region
        $region17: #{tpu_custom_call.1} parent=11 // pred_check
          %p182 = pneg %p94
        $region18: #{tpu_custom_call.1} parent=11 // pred_check_branch
          %184 = sbr.rel (%p182) target = $region20
        $region19: #{tpu_custom_call.1} parent=11 // pred_region
          _
        $region20: #{tpu_custom_call.1} parent=11 // pred_fallthru
          _
        // Predicated region
        $region21: #{tpu_custom_call.1} parent=11 // pred_check
          %p185 = pneg %p115
        $region22: #{tpu_custom_call.1} parent=11 // pred_check_branch
          %187 = sbr.rel (%p185) target = $region24
        $region23: #{tpu_custom_call.1} parent=11 // pred_region
          _
        $region24: #{tpu_custom_call.1} parent=11 // pred_fallthru
          _
        // Predicated region
        $region25: #{tpu_custom_call.1} parent=11 // pred_check
          %p188 = pneg %p136
        $region26: #{tpu_custom_call.1} parent=11 // pred_check_branch
          %190 = sbr.rel (%p188) target = $region28
        $region27: #{tpu_custom_call.1} parent=11 // pred_region
          _
        $region28: #{tpu_custom_call.1} parent=11 // pred_fallthru
          _
      $region12: #{tpu_custom_call.1} parent=5 // pred_fallthru
        _
      %p191 = scmp.lt.s32.totalorder %s14, 4
      // Predicated region
      $region29: #{tpu_custom_call.1} parent=5 // pred_check
        %p192 = pneg %p191
      $region30: #{tpu_custom_call.1} parent=5 // pred_check_branch
        %194 = sbr.rel (%p192) target = $region32
      $region31: #{tpu_custom_call.1} parent=5 // pred_region
        // Predicated region
        $region33: #{tpu_custom_call.1} parent=31 // pred_check
          %p195 = pneg %p46
        $region34: #{tpu_custom_call.1} parent=31 // pred_check_branch
          %197 = sbr.rel (%p195) target = $region36
        $region35: #{tpu_custom_call.1} parent=31 // pred_region
          %p198 = scmp.lt.s32.totalorder %s21, 1
          %s199 = scalar_select %p198, %s21, 1
          %s200 = smul.addr %s199, 54
          %s201 = smul.addr %s200, 8
          %s202 = scalar_lea.vmem %s0, %s201
        $region36: #{tpu_custom_call.1} parent=31 // pred_fallthru
          _
      $region32: #{tpu_custom_call.1} parent=5 // pred_fallthru
        _
      %p203 = scmp.le.s32.totalorder 1, %s14
      %p204 = scmp.lt.s32.totalorder %s14, 5
      %p205 = pnand %p203, %p204
      %p206 = pneg %p205
      // Predicated region
      $region37: #{tpu_custom_call.1} parent=5 // pred_check
        _
      $region38: #{tpu_custom_call.1} parent=5 // pred_check_branch
        %208 = sbr.rel (%p205) target = $region40
      $region39: #{tpu_custom_call.1} parent=5 // pred_region
        %s209 = ssub.s32 %s14, 1
        %p210 = scmp.lt.s32.totalorder %s23, 1
        %s211 = scalar_select %p210, %s23, 1
        %s212 = smul.addr %s211, 54
        %s213 = smul.addr %s212, 8
        %s214 = scalar_lea.vmem %s0, %s213
        %p215 = pneg %p52
        %p216 = pneg %p49
        %p217 = pneg %p73
        %p218 = pneg %p70
        %p219 = pneg %p94
        %p220 = pneg %p91
        %p221 = pneg %p115
        %p222 = pneg %p112
        %p223 = pneg %p136
        %p224 = pneg %p133
        %p225 = pneg %p164
        %p226 = pneg %p161
        %s227 = sand.u32 %s151, 1
        %s228 = scalar_lea.sflag [#allocation3], %s227
        %s229 = sand.u32 %s151, 1
        %s230 = smul.addr %s229, 128
        %s231 = scalar_lea.vmem [#allocation2], %s230
        %p232 = scmp.lt.s32.totalorder %s23, 1
        %s233 = scalar_select %p232, %s23, 1
        %s234 = smul.addr %s233, 54
        %s235 = smul.addr %s234, 8
        %s236 = scalar_lea.vmem %s0, %s235
        %s237 = smul.u32 8, %s24
        %s238 = smul.u32 %s24, 8
        %v239 = vld [vmem:[%s1] sm:$0xff]
        %v240 = vld [vmem:[%s1 + $0x8] sm:$0x1]
        %s241 = smul.u32 %s238, 24
        %s242 = scalar_lea.vmem %s236, %s241
        %v243 = vld [vmem:[%s242] sm:$0xff]
        %v244 = vld [vmem:[%s242 + $0x8] sm:$0xff]
        %v245 = vld [vmem:[%s242 + $0x18] sm:$0xff]
        %v246 = vld [vmem:[%s242 + $0x20] sm:$0xff]
        %v247 = vld [vmem:[%s242 + $0x30] sm:$0xff]
        %v248 = vld [vmem:[%s242 + $0x38] sm:$0xff]
        %v249 = vld [vmem:[%s242 + $0x48] sm:$0xff]
        %v250 = vld [vmem:[%s242 + $0x50] sm:$0xff]
        %v251 = vld [vmem:[%s242 + $0x60] sm:$0xff]
        %v252 = vld [vmem:[%s242 + $0x68] sm:$0xff]
        %v253 = vld [vmem:[%s242 + $0x78] sm:$0xff]
        %v254 = vld [vmem:[%s242 + $0x80] sm:$0xff]
        %v255 = vld [vmem:[%s242 + $0x90] sm:$0xff]
        %v256 = vld [vmem:[%s242 + $0x98] sm:$0xff]
        %v257 = vld [vmem:[%s242 + $0xa8] sm:$0xff]
        %v258 = vld [vmem:[%s242 + $0xb0] sm:$0xff]
        %v259 = vlaneseq
        %v260 = vshrl.u32 %v259, 7
        %v261 = vsub.s32 0, %v260
        %v262 = vrot.slane %v239, %v261
        %v263 = vmul.f32 %v243, %v262
        %v264 = vmul.f32 %v244, %v262
        %v265 = vmul.f32 %v245, %v262
        %v266 = vmul.f32 %v246, %v262
        %v267 = vmul.f32 %v247, %v262
        %v268 = vmul.f32 %v248, %v262
        %v269 = vmul.f32 %v249, %v262
        %v270 = vmul.f32 %v250, %v262
        %v271 = vmul.f32 %v251, %v262
        %v272 = vmul.f32 %v252, %v262
        %v273 = vmul.f32 %v253, %v262
        %v274 = vmul.f32 %v254, %v262
        %v275 = vmul.f32 %v255, %v262
        %v276 = vmul.f32 %v256, %v262
        %v277 = vmul.f32 %v257, %v262
        %v278 = vmul.f32 %v258, %v262
        %v279 = vadd.f32 %v263, 0.0
        %v280 = vadd.f32 %v264, 0.0
        %v281 = vadd.f32 %v265, 0.0
        %v282 = vadd.f32 %v266, 0.0
        %v283 = vadd.f32 %v267, 0.0
        %v284 = vadd.f32 %v268, 0.0
        %v285 = vadd.f32 %v269, 0.0
        %v286 = vadd.f32 %v270, 0.0
        %v287 = vadd.f32 %v271, 0.0
        %v288 = vadd.f32 %v272, 0.0
        %v289 = vadd.f32 %v273, 0.0
        %v290 = vadd.f32 %v274, 0.0
        %v291 = vadd.f32 %v275, 0.0
        %v292 = vadd.f32 %v276, 0.0
        %v293 = vadd.f32 %v277, 0.0
        %v294 = vadd.f32 %v278, 0.0
        %v295 = vld [vmem:[%s242 + $0x1] sm:$0xff]
        %v296 = vld [vmem:[%s242 + $0x9] sm:$0xff]
        %v297 = vld [vmem:[%s242 + $0x19] sm:$0xff]
        %v298 = vld [vmem:[%s242 + $0x21] sm:$0xff]
        %v299 = vld [vmem:[%s242 + $0x31] sm:$0xff]
        %v300 = vld [vmem:[%s242 + $0x39] sm:$0xff]
        %v301 = vld [vmem:[%s242 + $0x49] sm:$0xff]
        %v302 = vld [vmem:[%s242 + $0x51] sm:$0xff]
        %v303 = vld [vmem:[%s242 + $0x61] sm:$0xff]
        %v304 = vld [vmem:[%s242 + $0x69] sm:$0xff]
        %v305 = vld [vmem:[%s242 + $0x79] sm:$0xff]
        %v306 = vld [vmem:[%s242 + $0x81] sm:$0xff]
        %v307 = vld [vmem:[%s242 + $0x91] sm:$0xff]
        %v308 = vld [vmem:[%s242 + $0x99] sm:$0xff]
        %v309 = vld [vmem:[%s242 + $0xa9] sm:$0xff]
        %v310 = vld [vmem:[%s242 + $0xb1] sm:$0xff]
        %v311 = vlaneseq
        %v312 = vshrl.u32 %v311, 7
        %v313 = vsub.s32 1, %v312
        %v314 = vrot.slane %v239, %v313
        %v315 = vmul.f32 %v295, %v314
        %v316 = vmul.f32 %v296, %v314
        %v317 = vmul.f32 %v297, %v314
        %v318 = vmul.f32 %v298, %v314
        %v319 = vmul.f32 %v299, %v314
        %v320 = vmul.f32 %v300, %v314
        %v321 = vmul.f32 %v301, %v314
        %v322 = vmul.f32 %v302, %v314
        %v323 = vmul.f32 %v303, %v314
        %v324 = vmul.f32 %v304, %v314
        %v325 = vmul.f32 %v305, %v314
        %v326 = vmul.f32 %v306, %v314
        %v327 = vmul.f32 %v307, %v314
        %v328 = vmul.f32 %v308, %v314
        %v329 = vmul.f32 %v309, %v314
        %v330 = vmul.f32 %v310, %v314
        %v331 = vadd.f32 %v279, %v315
        %v332 = vadd.f32 %v280, %v316
        %v333 = vadd.f32 %v281, %v317
        %v334 = vadd.f32 %v282, %v318
        %v335 = vadd.f32 %v283, %v319
        %v336 = vadd.f32 %v284, %v320
        %v337 = vadd.f32 %v285, %v321
        %v338 = vadd.f32 %v286, %v322
        %v339 = vadd.f32 %v287, %v323
        %v340 = vadd.f32 %v288, %v324
        %v341 = vadd.f32 %v289, %v325
        %v342 = vadd.f32 %v290, %v326
        %v343 = vadd.f32 %v291, %v327
        %v344 = vadd.f32 %v292, %v328
        %v345 = vadd.f32 %v293, %v329
        %v346 = vadd.f32 %v294, %v330
        %v347 = vld [vmem:[%s242 + $0x2] sm:$0xff]
        %v348 = vld [vmem:[%s242 + $0xa] sm:$0xff]
        %v349 = vld [vmem:[%s242 + $0x1a] sm:$0xff]
        %v350 = vld [vmem:[%s242 + $0x22] sm:$0xff]
        %v351 = vld [vmem:[%s242 + $0x32] sm:$0xff]
        %v352 = vld [vmem:[%s242 + $0x3a] sm:$0xff]
        %v353 = vld [vmem:[%s242 + $0x4a] sm:$0xff]
        %v354 = vld [vmem:[%s242 + $0x52] sm:$0xff]
        %v355 = vld [vmem:[%s242 + $0x62] sm:$0xff]
        %v356 = vld [vmem:[%s242 + $0x6a] sm:$0xff]
        %v357 = vld [vmem:[%s242 + $0x7a] sm:$0xff]
        %v358 = vld [vmem:[%s242 + $0x82] sm:$0xff]
        %v359 = vld [vmem:[%s242 + $0x92] sm:$0xff]
        %v360 = vld [vmem:[%s242 + $0x9a] sm:$0xff]
        %v361 = vld [vmem:[%s242 + $0xaa] sm:$0xff]
        %v362 = vld [vmem:[%s242 + $0xb2] sm:$0xff]
        %v363 = vlaneseq
        %v364 = vshrl.u32 %v363, 7
        %v365 = vsub.s32 2, %v364
        %v366 = vrot.slane %v239, %v365
        %v367 = vmul.f32 %v347, %v366
        %v368 = vmul.f32 %v348, %v366
        %v369 = vmul.f32 %v349, %v366
        %v370 = vmul.f32 %v350, %v366
        %v371 = vmul.f32 %v351, %v366
        %v372 = vmul.f32 %v352, %v366
        %v373 = vmul.f32 %v353, %v366
        %v374 = vmul.f32 %v354, %v366
        %v375 = vmul.f32 %v355, %v366
        %v376 = vmul.f32 %v356, %v366
        %v377 = vmul.f32 %v357, %v366
        %v378 = vmul.f32 %v358, %v366
        %v379 = vmul.f32 %v359, %v366
        %v380 = vmul.f32 %v360, %v366
        %v381 = vmul.f32 %v361, %v366
        %v382 = vmul.f32 %v362, %v366
        %v383 = vadd.f32 %v331, %v367
        %v384 = vadd.f32 %v332, %v368
        %v385 = vadd.f32 %v333, %v369
        %v386 = vadd.f32 %v334, %v370
        %v387 = vadd.f32 %v335, %v371
        %v388 = vadd.f32 %v336, %v372
        %v389 = vadd.f32 %v337, %v373
        %v390 = vadd.f32 %v338, %v374
        %v391 = vadd.f32 %v339, %v375
        %v392 = vadd.f32 %v340, %v376
        %v393 = vadd.f32 %v341, %v377
        %v394 = vadd.f32 %v342, %v378
        %v395 = vadd.f32 %v343, %v379
        %v396 = vadd.f32 %v344, %v380
        %v397 = vadd.f32 %v345, %v381
        %v398 = vadd.f32 %v346, %v382
        %s399 = sadd.s32 %s238, 1
        %s400 = smul.u32 %s399, 24
        %s401 = scalar_lea.vmem %s236, %s400
        %v402 = vld [vmem:[%s401] sm:$0xff]
        %v403 = vld [vmem:[%s401 + $0x8] sm:$0xff]
        %v404 = vld [vmem:[%s401 + $0x18] sm:$0xff]
        %v405 = vld [vmem:[%s401 + $0x20] sm:$0xff]
        %v406 = vld [vmem:[%s401 + $0x30] sm:$0xff]
        %v407 = vld [vmem:[%s401 + $0x38] sm:$0xff]
        %v408 = vld [vmem:[%s401 + $0x48] sm:$0xff]
        %v409 = vld [vmem:[%s401 + $0x50] sm:$0xff]
        %v410 = vld [vmem:[%s401 + $0x60] sm:$0xff]
        %v411 = vld [vmem:[%s401 + $0x68] sm:$0xff]
        %v412 = vld [vmem:[%s401 + $0x78] sm:$0xff]
        %v413 = vld [vmem:[%s401 + $0x80] sm:$0xff]
        %v414 = vld [vmem:[%s401 + $0x90] sm:$0xff]
        %v415 = vld [vmem:[%s401 + $0x98] sm:$0xff]
        %v416 = vld [vmem:[%s401 + $0xa8] sm:$0xff]
        %v417 = vld [vmem:[%s401 + $0xb0] sm:$0xff]
        %v418 = vlaneseq
        %v419 = vshrl.u32 %v418, 7
        %v420 = vsub.s32 3, %v419
        %v421 = vrot.slane %v239, %v420
        %v422 = vmul.f32 %v402, %v421
        %v423 = vmul.f32 %v403, %v421
        %v424 = vmul.f32 %v404, %v421
        %v425 = vmul.f32 %v405, %v421
        %v426 = vmul.f32 %v406, %v421
        %v427 = vmul.f32 %v407, %v421
        %v428 = vmul.f32 %v408, %v421
        %v429 = vmul.f32 %v409, %v421
        %v430 = vmul.f32 %v410, %v421
        %v431 = vmul.f32 %v411, %v421
        %v432 = vmul.f32 %v412, %v421
        %v433 = vmul.f32 %v413, %v421
        %v434 = vmul.f32 %v414, %v421
        %v435 = vmul.f32 %v415, %v421
        %v436 = vmul.f32 %v416, %v421
        %v437 = vmul.f32 %v417, %v421
        %v438 = vadd.f32 %v383, %v422
        %v439 = vadd.f32 %v384, %v423
        %v440 = vadd.f32 %v385, %v424
        %v441 = vadd.f32 %v386, %v425
        %v442 = vadd.f32 %v387, %v426
        %v443 = vadd.f32 %v388, %v427
        %v444 = vadd.f32 %v389, %v428
        %v445 = vadd.f32 %v390, %v429
        %v446 = vadd.f32 %v391, %v430
        %v447 = vadd.f32 %v392, %v431
        %v448 = vadd.f32 %v393, %v432
        %v449 = vadd.f32 %v394, %v433
        %v450 = vadd.f32 %v395, %v434
        %v451 = vadd.f32 %v396, %v435
        %v452 = vadd.f32 %v397, %v436
        %v453 = vadd.f32 %v398, %v437
        %v454 = vld [vmem:[%s401 + $0x1] sm:$0xff]
        %v455 = vld [vmem:[%s401 + $0x9] sm:$0xff]
        %v456 = vld [vmem:[%s401 + $0x19] sm:$0xff]
        %v457 = vld [vmem:[%s401 + $0x21] sm:$0xff]
        %v458 = vld [vmem:[%s401 + $0x31] sm:$0xff]
        %v459 = vld [vmem:[%s401 + $0x39] sm:$0xff]
        %v460 = vld [vmem:[%s401 + $0x49] sm:$0xff]
        %v461 = vld [vmem:[%s401 + $0x51] sm:$0xff]
        %v462 = vld [vmem:[%s401 + $0x61] sm:$0xff]
        %v463 = vld [vmem:[%s401 + $0x69] sm:$0xff]
        %v464 = vld [vmem:[%s401 + $0x79] sm:$0xff]
        %v465 = vld [vmem:[%s401 + $0x81] sm:$0xff]
        %v466 = vld [vmem:[%s401 + $0x91] sm:$0xff]
        %v467 = vld [vmem:[%s401 + $0x99] sm:$0xff]
        %v468 = vld [vmem:[%s401 + $0xa9] sm:$0xff]
        %v469 = vld [vmem:[%s401 + $0xb1] sm:$0xff]
        %v470 = vlaneseq
        %v471 = vshrl.u32 %v470, 7
        %v472 = vsub.s32 4, %v471
        %v473 = vrot.slane %v239, %v472
        %v474 = vmul.f32 %v454, %v473
        %v475 = vmul.f32 %v455, %v473
        %v476 = vmul.f32 %v456, %v473
        %v477 = vmul.f32 %v457, %v473
        %v478 = vmul.f32 %v458, %v473
        %v479 = vmul.f32 %v459, %v473
        %v480 = vmul.f32 %v460, %v473
        %v481 = vmul.f32 %v461, %v473
        %v482 = vmul.f32 %v462, %v473
        %v483 = vmul.f32 %v463, %v473
        %v484 = vmul.f32 %v464, %v473
        %v485 = vmul.f32 %v465, %v473
        %v486 = vmul.f32 %v466, %v473
        %v487 = vmul.f32 %v467, %v473
        %v488 = vmul.f32 %v468, %v473
        %v489 = vmul.f32 %v469, %v473
        %v490 = vadd.f32 %v438, %v474
        %v491 = vadd.f32 %v439, %v475
        %v492 = vadd.f32 %v440, %v476
        %v493 = vadd.f32 %v441, %v477
        %v494 = vadd.f32 %v442, %v478
        %v495 = vadd.f32 %v443, %v479
        %v496 = vadd.f32 %v444, %v480
        %v497 = vadd.f32 %v445, %v481
        %v498 = vadd.f32 %v446, %v482
        %v499 = vadd.f32 %v447, %v483
        %v500 = vadd.f32 %v448, %v484
        %v501 = vadd.f32 %v449, %v485
        %v502 = vadd.f32 %v450, %v486
        %v503 = vadd.f32 %v451, %v487
        %v504 = vadd.f32 %v452, %v488
        %v505 = vadd.f32 %v453, %v489
        %v506 = vld [vmem:[%s401 + $0x2] sm:$0xff]
        %v507 = vld [vmem:[%s401 + $0xa] sm:$0xff]
        %v508 = vld [vmem:[%s401 + $0x1a] sm:$0xff]
        %v509 = vld [vmem:[%s401 + $0x22] sm:$0xff]
        %v510 = vld [vmem:[%s401 + $0x32] sm:$0xff]
        %v511 = vld [vmem:[%s401 + $0x3a] sm:$0xff]
        %v512 = vld [vmem:[%s401 + $0x4a] sm:$0xff]
        %v513 = vld [vmem:[%s401 + $0x52] sm:$0xff]
        %v514 = vld [vmem:[%s401 + $0x62] sm:$0xff]
        %v515 = vld [vmem:[%s401 + $0x6a] sm:$0xff]
        %v516 = vld [vmem:[%s401 + $0x7a] sm:$0xff]
        %v517 = vld [vmem:[%s401 + $0x82] sm:$0xff]
        %v518 = vld [vmem:[%s401 + $0x92] sm:$0xff]
        %v519 = vld [vmem:[%s401 + $0x9a] sm:$0xff]
        %v520 = vld [vmem:[%s401 + $0xaa] sm:$0xff]
        %v521 = vld [vmem:[%s401 + $0xb2] sm:$0xff]
        %v522 = vlaneseq
        %v523 = vshrl.u32 %v522, 7
        %v524 = vsub.s32 5, %v523
        %v525 = vrot.slane %v239, %v524
        %v526 = vmul.f32 %v506, %v525
        %v527 = vmul.f32 %v507, %v525
        %v528 = vmul.f32 %v508, %v525
        %v529 = vmul.f32 %v509, %v525
        %v530 = vmul.f32 %v510, %v525
        %v531 = vmul.f32 %v511, %v525
        %v532 = vmul.f32 %v512, %v525
        %v533 = vmul.f32 %v513, %v525
        %v534 = vmul.f32 %v514, %v525
        %v535 = vmul.f32 %v515, %v525
        %v536 = vmul.f32 %v516, %v525
        %v537 = vmul.f32 %v517, %v525
        %v538 = vmul.f32 %v518, %v525
        %v539 = vmul.f32 %v519, %v525
        %v540 = vmul.f32 %v520, %v525
        %v541 = vmul.f32 %v521, %v525
        %v542 = vadd.f32 %v490, %v526
        %v543 = vadd.f32 %v491, %v527
        %v544 = vadd.f32 %v492, %v528
        %v545 = vadd.f32 %v493, %v529
        %v546 = vadd.f32 %v494, %v530
        %v547 = vadd.f32 %v495, %v531
        %v548 = vadd.f32 %v496, %v532
        %v549 = vadd.f32 %v497, %v533
        %v550 = vadd.f32 %v498, %v534
        %v551 = vadd.f32 %v499, %v535
        %v552 = vadd.f32 %v500, %v536
        %v553 = vadd.f32 %v501, %v537
        %v554 = vadd.f32 %v502, %v538
        %v555 = vadd.f32 %v503, %v539
        %v556 = vadd.f32 %v504, %v540
        %v557 = vadd.f32 %v505, %v541
        %s558 = sadd.s32 %s238, 2
        %s559 = smul.u32 %s558, 24
        %s560 = scalar_lea.vmem %s236, %s559
        %v561 = vld [vmem:[%s560] sm:$0xff]
        %v562 = vld [vmem:[%s560 + $0x8] sm:$0xff]
        %v563 = vld [vmem:[%s560 + $0x18] sm:$0xff]
        %v564 = vld [vmem:[%s560 + $0x20] sm:$0xff]
        %v565 = vld [vmem:[%s560 + $0x30] sm:$0xff]
        %v566 = vld [vmem:[%s560 + $0x38] sm:$0xff]
        %v567 = vld [vmem:[%s560 + $0x48] sm:$0xff]
        %v568 = vld [vmem:[%s560 + $0x50] sm:$0xff]
        %v569 = vld [vmem:[%s560 + $0x60] sm:$0xff]
        %v570 = vld [vmem:[%s560 + $0x68] sm:$0xff]
        %v571 = vld [vmem:[%s560 + $0x78] sm:$0xff]
        %v572 = vld [vmem:[%s560 + $0x80] sm:$0xff]
        %v573 = vld [vmem:[%s560 + $0x90] sm:$0xff]
        %v574 = vld [vmem:[%s560 + $0x98] sm:$0xff]
        %v575 = vld [vmem:[%s560 + $0xa8] sm:$0xff]
        %v576 = vld [vmem:[%s560 + $0xb0] sm:$0xff]
        %v577 = vlaneseq
        %v578 = vshrl.u32 %v577, 7
        %v579 = vsub.s32 6, %v578
        %v580 = vrot.slane %v239, %v579
        %v581 = vmul.f32 %v561, %v580
        %v582 = vmul.f32 %v562, %v580
        %v583 = vmul.f32 %v563, %v580
        %v584 = vmul.f32 %v564, %v580
        %v585 = vmul.f32 %v565, %v580
        %v586 = vmul.f32 %v566, %v580
        %v587 = vmul.f32 %v567, %v580
        %v588 = vmul.f32 %v568, %v580
        %v589 = vmul.f32 %v569, %v580
        %v590 = vmul.f32 %v570, %v580
        %v591 = vmul.f32 %v571, %v580
        %v592 = vmul.f32 %v572, %v580
        %v593 = vmul.f32 %v573, %v580
        %v594 = vmul.f32 %v574, %v580
        %v595 = vmul.f32 %v575, %v580
        %v596 = vmul.f32 %v576, %v580
        %v597 = vadd.f32 %v542, %v581
        %v598 = vadd.f32 %v543, %v582
        %v599 = vadd.f32 %v544, %v583
        %v600 = vadd.f32 %v545, %v584
        %v601 = vadd.f32 %v546, %v585
        %v602 = vadd.f32 %v547, %v586
        %v603 = vadd.f32 %v548, %v587
        %v604 = vadd.f32 %v549, %v588
        %v605 = vadd.f32 %v550, %v589
        %v606 = vadd.f32 %v551, %v590
        %v607 = vadd.f32 %v552, %v591
        %v608 = vadd.f32 %v553, %v592
        %v609 = vadd.f32 %v554, %v593
        %v610 = vadd.f32 %v555, %v594
        %v611 = vadd.f32 %v556, %v595
        %v612 = vadd.f32 %v557, %v596
        %v613 = vld [vmem:[%s560 + $0x1] sm:$0xff]
        %v614 = vld [vmem:[%s560 + $0x9] sm:$0xff]
        %v615 = vld [vmem:[%s560 + $0x19] sm:$0xff]
        %v616 = vld [vmem:[%s560 + $0x21] sm:$0xff]
        %v617 = vld [vmem:[%s560 + $0x31] sm:$0xff]
        %v618 = vld [vmem:[%s560 + $0x39] sm:$0xff]
        %v619 = vld [vmem:[%s560 + $0x49] sm:$0xff]
        %v620 = vld [vmem:[%s560 + $0x51] sm:$0xff]
        %v621 = vld [vmem:[%s560 + $0x61] sm:$0xff]
        %v622 = vld [vmem:[%s560 + $0x69] sm:$0xff]
        %v623 = vld [vmem:[%s560 + $0x79] sm:$0xff]
        %v624 = vld [vmem:[%s560 + $0x81] sm:$0xff]
        %v625 = vld [vmem:[%s560 + $0x91] sm:$0xff]
        %v626 = vld [vmem:[%s560 + $0x99] sm:$0xff]
        %v627 = vld [vmem:[%s560 + $0xa9] sm:$0xff]
        %v628 = vld [vmem:[%s560 + $0xb1] sm:$0xff]
        %v629 = vlaneseq
        %v630 = vshrl.u32 %v629, 7
        %v631 = vsub.s32 7, %v630
        %v632 = vrot.slane %v239, %v631
        %v633 = vmul.f32 %v613, %v632
        %v634 = vmul.f32 %v614, %v632
        %v635 = vmul.f32 %v615, %v632
        %v636 = vmul.f32 %v616, %v632
        %v637 = vmul.f32 %v617, %v632
        %v638 = vmul.f32 %v618, %v632
        %v639 = vmul.f32 %v619, %v632
        %v640 = vmul.f32 %v620, %v632
        %v641 = vmul.f32 %v621, %v632
        %v642 = vmul.f32 %v622, %v632
        %v643 = vmul.f32 %v623, %v632
        %v644 = vmul.f32 %v624, %v632
        %v645 = vmul.f32 %v625, %v632
        %v646 = vmul.f32 %v626, %v632
        %v647 = vmul.f32 %v627, %v632
        %v648 = vmul.f32 %v628, %v632
        %v649 = vadd.f32 %v597, %v633
        %v650 = vadd.f32 %v598, %v634
        %v651 = vadd.f32 %v599, %v635
        %v652 = vadd.f32 %v600, %v636
        %v653 = vadd.f32 %v601, %v637
        %v654 = vadd.f32 %v602, %v638
        %v655 = vadd.f32 %v603, %v639
        %v656 = vadd.f32 %v604, %v640
        %v657 = vadd.f32 %v605, %v641
        %v658 = vadd.f32 %v606, %v642
        %v659 = vadd.f32 %v607, %v643
        %v660 = vadd.f32 %v608, %v644
        %v661 = vadd.f32 %v609, %v645
        %v662 = vadd.f32 %v610, %v646
        %v663 = vadd.f32 %v611, %v647
        %v664 = vadd.f32 %v612, %v648
        %v665 = vld [vmem:[%s560 + $0x2] sm:$0xff]
        %v666 = vld [vmem:[%s560 + $0xa] sm:$0xff]
        %v667 = vld [vmem:[%s560 + $0x1a] sm:$0xff]
        %v668 = vld [vmem:[%s560 + $0x22] sm:$0xff]
        %v669 = vld [vmem:[%s560 + $0x32] sm:$0xff]
        %v670 = vld [vmem:[%s560 + $0x3a] sm:$0xff]
        %v671 = vld [vmem:[%s560 + $0x4a] sm:$0xff]
        %v672 = vld [vmem:[%s560 + $0x52] sm:$0xff]
        %v673 = vld [vmem:[%s560 + $0x62] sm:$0xff]
        %v674 = vld [vmem:[%s560 + $0x6a] sm:$0xff]
        %v675 = vld [vmem:[%s560 + $0x7a] sm:$0xff]
        %v676 = vld [vmem:[%s560 + $0x82] sm:$0xff]
        %v677 = vld [vmem:[%s560 + $0x92] sm:$0xff]
        %v678 = vld [vmem:[%s560 + $0x9a] sm:$0xff]
        %v679 = vld [vmem:[%s560 + $0xaa] sm:$0xff]
        %v680 = vld [vmem:[%s560 + $0xb2] sm:$0xff]
        %v681 = vlaneseq
        %v682 = vshrl.u32 %v681, 7
        %v683 = vsub.s32 0, %v682
        %v684 = vrot.slane %v240, %v683
        %v685 = vmul.f32 %v665, %v684
        %v686 = vmul.f32 %v666, %v684
        %v687 = vmul.f32 %v667, %v684
        %v688 = vmul.f32 %v668, %v684
        %v689 = vmul.f32 %v669, %v684
        %v690 = vmul.f32 %v670, %v684
        %v691 = vmul.f32 %v671, %v684
        %v692 = vmul.f32 %v672, %v684
        %v693 = vmul.f32 %v673, %v684
        %v694 = vmul.f32 %v674, %v684
        %v695 = vmul.f32 %v675, %v684
        %v696 = vmul.f32 %v676, %v684
        %v697 = vmul.f32 %v677, %v684
        %v698 = vmul.f32 %v678, %v684
        %v699 = vmul.f32 %v679, %v684
        %v700 = vmul.f32 %v680, %v684
        %v701 = vadd.f32 %v649, %v685
        %v702 = vadd.f32 %v650, %v686
        %v703 = vadd.f32 %v651, %v687
        %v704 = vadd.f32 %v652, %v688
        %v705 = vadd.f32 %v653, %v689
        %v706 = vadd.f32 %v654, %v690
        %v707 = vadd.f32 %v655, %v691
        %v708 = vadd.f32 %v656, %v692
        %v709 = vadd.f32 %v657, %v693
        %v710 = vadd.f32 %v658, %v694
        %v711 = vadd.f32 %v659, %v695
        %v712 = vadd.f32 %v660, %v696
        %v713 = vadd.f32 %v661, %v697
        %v714 = vadd.f32 %v662, %v698
        %v715 = vadd.f32 %v663, %v699
        %v716 = vadd.f32 %v664, %v700
        %v717 = vld [vmem:[%s2] sm:$0x1]
        %v719 = vlaneseq
        %v720 = vshrl.u32 %v719, 7
        %v721 = vsub.s32 0, %v720
        %v722 = vrot.slane %v717, %v721
        %v724 = vadd.f32 %v701, %v722
        %v725 = vadd.f32 %v702, %v722
        %v726 = vadd.f32 %v703, %v722
        %v727 = vadd.f32 %v704, %v722
        %v728 = vadd.f32 %v705, %v722
        %v729 = vadd.f32 %v706, %v722
        %v730 = vadd.f32 %v707, %v722
        %v731 = vadd.f32 %v708, %v722
        %v732 = vadd.f32 %v709, %v722
        %v733 = vadd.f32 %v710, %v722
        %v734 = vadd.f32 %v711, %v722
        %v735 = vadd.f32 %v712, %v722
        %v736 = vadd.f32 %v713, %v722
        %v737 = vadd.f32 %v714, %v722
        %v738 = vadd.f32 %v715, %v722
        %v739 = vadd.f32 %v716, %v722
        %v740 = vmax.f32 %v724, 0.0
        %v741 = vmax.f32 %v725, 0.0
        %v742 = vmax.f32 %v726, 0.0
        %v743 = vmax.f32 %v727, 0.0
        %v744 = vmax.f32 %v728, 0.0
        %v745 = vmax.f32 %v729, 0.0
        %v746 = vmax.f32 %v730, 0.0
        %v747 = vmax.f32 %v731, 0.0
        %v748 = vmax.f32 %v732, 0.0
        %v749 = vmax.f32 %v733, 0.0
        %v750 = vmax.f32 %v734, 0.0
        %v751 = vmax.f32 %v735, 0.0
        %v752 = vmax.f32 %v736, 0.0
        %v753 = vmax.f32 %v737, 0.0
        %v754 = vmax.f32 %v738, 0.0
        %v755 = vmax.f32 %v739, 0.0
        %v756 = vld [vmem:[%s3] sm:$0xff]
        %v757 = vld [vmem:[%s4] sm:$0x1]
        %v759 = vlaneseq
        %v760 = vshrl.u32 %v759, 7
        %v761 = vsub.s32 0, %v760
        %v762 = vrot.slane %v757, %v761
        %vm764 = vcmask 64512
        %v766 = vsel %vm764, %v740, 0
        %v769 = vsel %vm764, %v741, 0
        %v772 = vsel %vm764, %v742, 0
        %v775 = vsel %vm764, %v743, 0
        %v778 = vsel %vm764, %v744, 0
        %v781 = vsel %vm764, %v745, 0
        %v784 = vsel %vm764, %v746, 0
        %v787 = vsel %vm764, %v747, 0
        %v790 = vsel %vm764, %v748, 0
        %v793 = vsel %vm764, %v749, 0
        %v796 = vsel %vm764, %v750, 0
        %v799 = vsel %vm764, %v751, 0
        %v802 = vsel %vm764, %v752, 0
        %v805 = vsel %vm764, %v753, 0
        %v808 = vsel %vm764, %v754, 0
        %v811 = vsel %vm764, %v755, 0
        %813 = vmatprep.subr.mxu0 0.0
        %814 = vmatpush1.msra.mxu0 %v756
        %815 = vmatprep.subr.mxu0 0.0
        %816 = vmatpush1.msra.mxu0 0.0
        %817 = vmatprep.subr.mxu0 0.0
        %818 = vmatpush1.msra.mxu0 0.0
        %819 = vmatprep.subr.mxu0 0.0
        %820 = vmatpush1.msra.mxu0 0.0
        %821 = vmatprep.subr.mxu0 0.0
        %822 = vmatpush1.msra.mxu0 0.0
        %823 = vmatprep.subr.mxu0 0.0
        %824 = vmatpush1.msra.mxu0 0.0
        %825 = vmatprep.subr.mxu0 0.0
        %826 = vmatpush1.msra.mxu0 0.0
        %827 = vmatprep.subr.mxu0 0.0
        %828 = vmatpush1.msra.mxu0 0.0
        %829 = vmatprep.subr.mxu0 0.0
        %830 = vmatpush1.msra.mxu0 0.0
        %831 = vmatprep.subr.mxu0 0.0
        %832 = vmatpush1.msra.mxu0 0.0
        %833 = vmatprep.subr.mxu0 0.0
        %834 = vmatpush1.msra.mxu0 0.0
        %835 = vmatprep.subr.mxu0 0.0
        %836 = vmatpush1.msra.mxu0 0.0
        %837 = vmatprep.subr.mxu0 0.0
        %838 = vmatpush1.msra.mxu0 0.0
        %839 = vmatprep.subr.mxu0 0.0
        %840 = vmatpush1.msra.mxu0 0.0
        %841 = vmatprep.subr.mxu0 0.0
        %842 = vmatpush1.msra.mxu0 0.0
        %843 = vmatprep.subr.mxu0 0.0
        %844 = vmatpush1.msra.mxu0 0.0
        %845 = vmatprep.subr.mxu0 0.0
        %846 = vmatpush1.msra.mxu0 0.0
        %847 = vmatprep.subr.mxu0 0.0
        %848 = vmatpush1.msra.mxu0 0.0
        %849 = vmatprep.subr.mxu0 0.0
        %850 = vmatpush1.msra.mxu0 0.0
        %851 = vmatprep.subr.mxu0 0.0
        %852 = vmatpush1.msra.mxu0 0.0
        %853 = vmatprep.subr.mxu0 0.0
        %854 = vmatpush1.msra.mxu0 0.0
        %855 = vmatprep.subr.mxu0 0.0
        %856 = vmatpush1.msra.mxu0 0.0
        %857 = vmatprep.subr.mxu0 0.0
        %858 = vmatpush1.msra.mxu0 0.0
        %859 = vmatprep.subr.mxu0 0.0
        %860 = vmatpush1.msra.mxu0 0.0
        %861 = vmatprep.subr.mxu0 0.0
        %862 = vmatpush1.msra.mxu0 0.0
        %863 = vmatprep.subr.mxu0 0.0
        %864 = vmatpush1.msra.mxu0 0.0
        %865 = vmatprep.subr.mxu0 0.0
        %866 = vmatpush1.msra.mxu0 0.0
        %867 = vmatprep.subr.mxu0 0.0
        %868 = vmatpush1.msra.mxu0 0.0
        %869 = vmatprep.subr.mxu0 0.0
        %870 = vmatpush1.msra.mxu0 0.0
        %871 = vmatprep.subr.mxu0 0.0
        %872 = vmatpush1.msra.mxu0 0.0
        %873 = vmatprep.subr.mxu0 0.0
        %874 = vmatpush1.msra.mxu0 0.0
        %875 = vmatprep.subr.mxu0 0.0
        %876 = vmatpush1.msra.mxu0 0.0
        %877 = vmatprep.mubr.f32.mxu0 0.0
        %878 = vmatmul.mubr.f32.gmra.mrb[0].mxu0 %v766
        %v879 = vpop.f32.mrb[0].mxu0
        %v880 = vadd.f32 %v762, %v879
        %v881 = vpop.f32.mrb[0].mxu0
        %882 = vmatprep.mubr.f32.mxu0 0.0
        %883 = vmatmul.mubr.f32.gmra.mrb[0].mxu0 %v769
        %v884 = vpop.f32.mrb[0].mxu0
        %v885 = vadd.f32 %v762, %v884
        %v886 = vpop.f32.mrb[0].mxu0
        %887 = vmatprep.mubr.f32.mxu0 0.0
        %888 = vmatmul.mubr.f32.gmra.mrb[0].mxu0 %v772
        %v889 = vpop.f32.mrb[0].mxu0
        %v890 = vadd.f32 %v762, %v889
        %v891 = vpop.f32.mrb[0].mxu0
        %892 = vmatprep.mubr.f32.mxu0 0.0
        %893 = vmatmul.mubr.f32.gmra.mrb[0].mxu0 %v775
        %v894 = vpop.f32.mrb[0].mxu0
        %v895 = vadd.f32 %v762, %v894
        %v896 = vpop.f32.mrb[0].mxu0
        %897 = vmatprep.mubr.f32.mxu0 0.0
        %898 = vmatmul.mubr.f32.gmra.mrb[0].mxu0 %v778
        %v899 = vpop.f32.mrb[0].mxu0
        %v900 = vadd.f32 %v762, %v899
        %v901 = vpop.f32.mrb[0].mxu0
        %902 = vmatprep.mubr.f32.mxu0 0.0
        %903 = vmatmul.mubr.f32.gmra.mrb[0].mxu0 %v781
        %v904 = vpop.f32.mrb[0].mxu0
        %v905 = vadd.f32 %v762, %v904
        %v906 = vpop.f32.mrb[0].mxu0
        %907 = vmatprep.mubr.f32.mxu0 0.0
        %908 = vmatmul.mubr.f32.gmra.mrb[0].mxu0 %v784
        %v909 = vpop.f32.mrb[0].mxu0
        %v910 = vadd.f32 %v762, %v909
        %v911 = vpop.f32.mrb[0].mxu0
        %912 = vmatprep.mubr.f32.mxu0 0.0
        %913 = vmatmul.mubr.f32.gmra.mrb[0].mxu0 %v787
        %v914 = vpop.f32.mrb[0].mxu0
        %v915 = vadd.f32 %v762, %v914
        %v916 = vpop.f32.mrb[0].mxu0
        %917 = vmatprep.mubr.f32.mxu0 0.0
        %918 = vmatmul.mubr.f32.gmra.mrb[0].mxu0 %v790
        %v919 = vpop.f32.mrb[0].mxu0
        %v920 = vadd.f32 %v762, %v919
        %v921 = vpop.f32.mrb[0].mxu0
        %922 = vmatprep.mubr.f32.mxu0 0.0
        %923 = vmatmul.mubr.f32.gmra.mrb[0].mxu0 %v793
        %v924 = vpop.f32.mrb[0].mxu0
        %v925 = vadd.f32 %v762, %v924
        %v926 = vpop.f32.mrb[0].mxu0
        %927 = vmatprep.mubr.f32.mxu0 0.0
        %928 = vmatmul.mubr.f32.gmra.mrb[0].mxu0 %v796
        %v929 = vpop.f32.mrb[0].mxu0
        %v930 = vadd.f32 %v762, %v929
        %v931 = vpop.f32.mrb[0].mxu0
        %932 = vmatprep.mubr.f32.mxu0 0.0
        %933 = vmatmul.mubr.f32.gmra.mrb[0].mxu0 %v799
        %v934 = vpop.f32.mrb[0].mxu0
        %v935 = vadd.f32 %v762, %v934
        %v936 = vpop.f32.mrb[0].mxu0
        %937 = vmatprep.mubr.f32.mxu0 0.0
        %938 = vmatmul.mubr.f32.gmra.mrb[0].mxu0 %v802
        %v939 = vpop.f32.mrb[0].mxu0
        %v940 = vadd.f32 %v762, %v939
        %v941 = vpop.f32.mrb[0].mxu0
        %942 = vmatprep.mubr.f32.mxu0 0.0
        %943 = vmatmul.mubr.f32.gmra.mrb[0].mxu0 %v805
        %v944 = vpop.f32.mrb[0].mxu0
        %v945 = vadd.f32 %v762, %v944
        %v946 = vpop.f32.mrb[0].mxu0
        %947 = vmatprep.mubr.f32.mxu0 0.0
        %948 = vmatmul.mubr.f32.gmra.mrb[0].mxu0 %v808
        %v949 = vpop.f32.mrb[0].mxu0
        %v950 = vadd.f32 %v762, %v949
        %v951 = vpop.f32.mrb[0].mxu0
        %952 = vmatprep.mubr.f32.mxu0 0.0
        %953 = vmatmul.mubr.f32.gmra.mrb[0].mxu0 %v811
        %v954 = vpop.f32.mrb[0].mxu0
        %v955 = vadd.f32 %v762, %v954
        %v956 = vpop.f32.mrb[0].mxu0
        %957 = vdwg.mxu0
        %v958 = vmax.f32 %v880, 0.0
        %v959 = vmax.f32 %v885, 0.0
        %v960 = vmax.f32 %v890, 0.0
        %v961 = vmax.f32 %v895, 0.0
        %v962 = vmax.f32 %v900, 0.0
        %v963 = vmax.f32 %v905, 0.0
        %v964 = vmax.f32 %v910, 0.0
        %v965 = vmax.f32 %v915, 0.0
        %v966 = vmax.f32 %v920, 0.0
        %v967 = vmax.f32 %v925, 0.0
        %v968 = vmax.f32 %v930, 0.0
        %v969 = vmax.f32 %v935, 0.0
        %v970 = vmax.f32 %v940, 0.0
        %v971 = vmax.f32 %v945, 0.0
        %v972 = vmax.f32 %v950, 0.0
        %v973 = vmax.f32 %v955, 0.0
        %vm974 = vcmask 130048
        %975 = vst.msk [vmem:[%s231] sm:$0xff] %vm974, %v958
        %976 = vst.msk [vmem:[%s231 + $0x8] sm:$0xff] %vm974, %v959
        %977 = vst.msk [vmem:[%s231 + $0x10] sm:$0xff] %vm974, %v960
        %978 = vst.msk [vmem:[%s231 + $0x18] sm:$0xff] %vm974, %v961
        %979 = vst.msk [vmem:[%s231 + $0x20] sm:$0xff] %vm974, %v962
        %980 = vst.msk [vmem:[%s231 + $0x28] sm:$0xff] %vm974, %v963
        %981 = vst.msk [vmem:[%s231 + $0x30] sm:$0xff] %vm974, %v964
        %982 = vst.msk [vmem:[%s231 + $0x38] sm:$0xff] %vm974, %v965
        %983 = vst.msk [vmem:[%s231 + $0x40] sm:$0xff] %vm974, %v966
        %984 = vst.msk [vmem:[%s231 + $0x48] sm:$0xff] %vm974, %v967
        %985 = vst.msk [vmem:[%s231 + $0x50] sm:$0xff] %vm974, %v968
        %986 = vst.msk [vmem:[%s231 + $0x58] sm:$0xff] %vm974, %v969
        %987 = vst.msk [vmem:[%s231 + $0x60] sm:$0xff] %vm974, %v970
        %988 = vst.msk [vmem:[%s231 + $0x68] sm:$0xff] %vm974, %v971
        %989 = vst.msk [vmem:[%s231 + $0x70] sm:$0xff] %vm974, %v972
        %990 = vst.msk [vmem:[%s231 + $0x78] sm:$0xff] %vm974, %v973
        %s991 = sand.u32 %s151, 1
        %s992 = scalar_lea.sflag [#allocation3], %s991
        %s993 = sand.u32 %s151, 1
        %s994 = smul.addr %s993, 128
        %s995 = scalar_lea.vmem [#allocation2], %s994
        // Predicated region
        $region41: #{tpu_custom_call.1} parent=39 // pred_check
          %p996 = pneg %p161
        $region42: #{tpu_custom_call.1} parent=39 // pred_check_branch
          %998 = sbr.rel (%p996) target = $region44
        $region43: #{tpu_custom_call.1} parent=39 // pred_region
          %s999 = smul.u32 8, %s24
          %s1001 = ssub.s32 2048, 2048
          %1002 = vsyncadd %s992, %s1001
          %s1003 = smul.addr %s999, 2
          %s1004 = smul.addr %s23, 32
          %s1005 = sadd.s32 %s1003, %s1004
          %s1006 = smul.addr %s1005, 128
          %s1007 = scalar_lea.hbm %s5, %s1006
          %s1008 = sshll.u32 %s995, 4
          %s1009 = int_to_ptr.vmem [resolvable:$true] %s1008
          %1014 = dma.vmem_to_hbm [thread:$0]  %s1009, 2048, %s1007, %s992, 128, 128, 8
        $region44: #{tpu_custom_call.1} parent=39 // pred_fallthru
          _
      $region40: #{tpu_custom_call.1} parent=5 // pred_fallthru
        _
      %p1015 = scmp.le.s32.totalorder 2, %s14
      // Predicated region
      $region45: #{tpu_custom_call.1} parent=5 // pred_check
        %p1016 = pneg %p1015
      $region46: #{tpu_custom_call.1} parent=5 // pred_check_branch
        %1018 = sbr.rel (%p1016) target = $region48
      $region47: #{tpu_custom_call.1} parent=5 // pred_region
        %s1019 = ssub.s32 %s14, 2
        // Predicated region
        $region49: #{tpu_custom_call.1} parent=47 // pred_check
          %p1020 = pneg %p167
        $region50: #{tpu_custom_call.1} parent=47 // pred_check_branch
          %1022 = sbr.rel (%p1020) target = $region52
        $region51: #{tpu_custom_call.1} parent=47 // pred_region
          %s1023 = sand.u32 %s152, 1
          %s1024 = scalar_lea.sflag [#allocation3], %s1023
          %s1025 = sand.u32 %s152, 1
          %s1026 = smul.addr %s1025, 128
          %s1027 = scalar_lea.vmem [#allocation2], %s1026
          %1028 = dma.done %s1024, 2048
        $region52: #{tpu_custom_call.1} parent=47 // pred_fallthru
          _
      $region48: #{tpu_custom_call.1} parent=5 // pred_fallthru
        _
    $region6: #{tpu_custom_call.1} parent=1 // loop_footer
      %s18 = sadd.s32 1, %s14
    $region7: #{tpu_custom_call.1} parent=1 // loop_footer_branch
      %13 = sbr.rel target = $region3
    $region8: #{tpu_custom_call.1} parent=1 // loop_exit
      _
    %1029 = vsyncpa [#allocation3], 1
    %s1030 = scalar_lea.sflag [#allocation3], 1
    %1031 = vsyncpa %s1030, 1

</llo_original>
